<compile_context>
chip_gen: v6e
topology: v6e:2x2x1
jax: 0.10.0
libtpu: 0.0.40
codegen_flags: <defaults>
</compile_context>

<pallas_src>
import functools

import jax
import jax.numpy as jnp
from jax.experimental import pallas as pl
from jax.experimental.pallas import tpu as pltpu


def _focal_loss_kernel(logits_ref, targets_ref, alpha_t_ref, out_ref, *, gamma):
    logits = logits_ref[...].astype(jnp.float32)            # (TILE_N, C)
    tgt = targets_ref[...]                                   # (TILE_N, 1) int32
    alpha_t = alpha_t_ref[...]                                # (TILE_N, 1) f32; 0 on padded rows

    class_ids = jax.lax.broadcasted_iota(jnp.int32, logits.shape, 1)
    is_tgt = class_ids == tgt                                 # (TILE_N, C) bool; no f32 one-hot

    # Numerically-stable softmax pieces: a single dense exp, no exp(-ce).
    m = jnp.max(logits, axis=1, keepdims=True)                # (TILE_N, 1)
    p = jnp.exp(logits - m)                                    # (TILE_N, C) dense EUP pass
    sumexp = jnp.sum(p, axis=1, keepdims=True)                 # (TILE_N, 1)
    tgt_exp = jnp.sum(jnp.where(is_tgt, p, 0.0), axis=1, keepdims=True)
    tgt_logit = jnp.sum(jnp.where(is_tgt, logits, 0.0), axis=1, keepdims=True)

    # ce = logsumexp - target_logit, clamped so pt <= 1 despite rounding.
    ce = jnp.maximum(jnp.log(sumexp) + (m - tgt_logit), 0.0)   # (TILE_N, 1)
    pt = tgt_exp * pl.reciprocal(sumexp, approx=True)           # rides the EUP slot
    base = jnp.maximum(1.0 - pt, 0.0)

    # Static gamma: integer -> VALU multiply chain; otherwise float pow.
    g = float(gamma)
    if g == int(g) and 0 <= int(g) <= 8:
        ig = int(g)
        w = jnp.ones_like(base) if ig == 0 else base
        for _ in range(max(ig - 1, 0)):
            w = w * base
    else:
        w = base ** g

    focal = alpha_t * (w * ce)                                  # (TILE_N, 1)
    out_ref[...] = jnp.sum(focal).reshape(1, 1, 1)              # per-tile partial sum


def _round_up(x, m):
    return ((x + m - 1) // m) * m


def _cdiv(a, b):
    return -(-a // b)


def _vmem_capacity_bytes():
    try:
        return int(pltpu.get_tpu_info().vmem_capacity_bytes)
    except Exception:
        return 64 * 1024 * 1024  # conservative (v7x-class) fallback


def focal_loss(logits, targets, alpha=None, gamma=2.0, reduction="mean"):
    """logits: (N, C) float, targets: (N,) int, alpha: None | scalar | (C,)."""
    if reduction not in ("mean", "sum"):
        # TODO(synk): reduction='none' needs a per-row (N,) output block instead of partial sums.
        raise NotImplementedError("only 'mean' and 'sum' reductions are implemented")

    n, c = logits.shape
    targets = targets.astype(jnp.int32)
    itemsize = jnp.dtype(logits.dtype).itemsize
    row_mult = max(8, 32 // itemsize)        # sublane packing: 8 (f32), 16 (bf16), 32 (int8/fp8)

    # Per-row alpha weight gathered in the wrapper (cheap XLA gather), padded rows -> 0.
    if alpha is None:
        alpha_t = jnp.ones((n,), dtype=jnp.float32)
    elif isinstance(alpha, (float, int)):
        alpha_t = jnp.full((n,), float(alpha), dtype=jnp.float32)
    else:
        alpha_t = jnp.asarray(alpha, dtype=jnp.float32)[targets]

    # Per-generation block budget and scoped-VMEM limit. BlockSpec double-buffers
    # each input and the in-kernel f32 temporaries are a few x the block, so keep
    # headroom: v7x (64 MiB physical VMEM) -> 4 MiB blocks / 48 MiB limit,
    # v5e/v6e (128 MiB physical) -> 8 MiB blocks / 96 MiB limit.
    if _vmem_capacity_bytes() <= 64 * 1024 * 1024:
        block_budget, vmem_limit = 4 * 1024 * 1024, 48 * 1024 * 1024
    else:
        block_budget, vmem_limit = 8 * 1024 * 1024, 96 * 1024 * 1024

    # Rows per tile: target ~block_budget bytes of logits per block (>= the ~1-2 MiB
    # needed to hit HBM roofline), balanced across tiles so row padding stays tiny.
    tile_cap = block_budget // max(c * itemsize, 1)
    tile_cap = max(row_mult, min(65536, (tile_cap // row_mult) * row_mult))
    num_tiles = _cdiv(n, tile_cap)
    tile_n = _round_up(_cdiv(n, num_tiles), row_mult)
    n_pad = num_tiles * tile_n

    # Row padding only when needed; padded rows get alpha_t == 0 so they contribute 0.
    # TODO(synk): mask the ragged tail in-kernel to avoid this copy entirely.
    if n_pad != n:
        logits = jnp.pad(logits, ((0, n_pad - n), (0, 0)))
        targets = jnp.pad(targets, (0, n_pad - n))
        alpha_t = jnp.pad(alpha_t, (0, n_pad - n))
    targets_col = targets.reshape(n_pad, 1)
    alpha_col = alpha_t.reshape(n_pad, 1)

    kernel = functools.partial(_focal_loss_kernel, gamma=float(gamma))
    # TODO(synk): on v7x, sweep pipeline_mode=pl.Buffered(3) on the logits spec if the
    #             profile still shows exposed DMA after the block-size bump.
    partials = pl.pallas_call(
        kernel,
        out_shape=jax.ShapeDtypeStruct((num_tiles, 1, 1), jnp.float32),
        grid=(num_tiles,),
        in_specs=[
            pl.BlockSpec((tile_n, c), lambda i: (i, 0)),    # full class dim: no pad copy
            pl.BlockSpec((tile_n, 1), lambda i: (i, 0)),
            pl.BlockSpec((tile_n, 1), lambda i: (i, 0)),
        ],
        out_specs=pl.BlockSpec((1, 1, 1), lambda i: (i, 0, 0)),
        compiler_params=pltpu.CompilerParams(
            dimension_semantics=("parallel",),
            vmem_limit_bytes=vmem_limit,
        ),
    )(logits, targets_col, alpha_col)

    total = jnp.sum(partials)
    return total / n if reduction == "mean" else total


def focal_loss_ref(logits, targets, alpha, gamma=2.0):
    """Pure-JAX reference matching torch F.cross_entropy + focal weighting (mean)."""
    logz = jax.nn.log_softmax(logits.astype(jnp.float32), axis=-1)
    ce = -jnp.take_along_axis(logz, targets[:, None], axis=-1)[:, 0]
    pt = jnp.exp(-ce)
    focal = (1.0 - pt) ** gamma * ce
    if alpha is not None:
        if isinstance(alpha, (float, int)):
            focal = alpha * focal
        else:
            focal = jnp.asarray(alpha)[targets] * focal
    return focal.mean()


if __name__ == "__main__":
    key = jax.random.PRNGKey(0)
    k1, k2 = jax.random.split(key)

    N, C = 8, 16                     # small shapes: batch=8, num_classes=16
    logits = jax.random.normal(k1, (N, C), dtype=jnp.float32)
    targets = jax.random.randint(k2, (N,), 0, C, dtype=jnp.int32)
    # Deterministic per-class alpha weights (module allows None / scalar / per-class alpha).
    alpha = jnp.linspace(0.5, 1.5, C, dtype=jnp.float32)

    out = jax.block_until_ready(focal_loss(logits, targets, alpha, gamma=2.0))
    ref = focal_loss_ref(logits, targets, alpha, gamma=2.0)
    # Tolerance covers the EUP approximate reciprocal used for pt = tgt_exp / sumexp.
    assert jnp.allclose(out, ref, rtol=2e-3, atol=2e-3), (out, ref)

    # Also exercise the alpha=None path (pure focal CE).
    out2 = jax.block_until_ready(focal_loss(logits, targets, None, gamma=2.0))
    ref2 = focal_loss_ref(logits, targets, None, gamma=2.0)
    assert jnp.allclose(out2, ref2, rtol=2e-3, atol=2e-3), (out2, ref2)

    print("KERNEL_OK")
</pallas_src>

<mosaic_0001>
module attributes {stable_mosaic.version = 11 : i64} {
  func.func @_focal_loss_kernel(%arg0: i32, %arg1: memref<8x16xf32, #tpu.memory_space<vmem>>, %arg2: memref<8x1xi32, #tpu.memory_space<vmem>>, %arg3: memref<8x1xf32, #tpu.memory_space<vmem>>, %arg4: memref<1x1x1xf32, #tpu.memory_space<vmem>>) attributes {dimension_semantics = [#tpu.dimension_semantics<parallel>], iteration_bounds = array<i64: 1>, scalar_prefetch = 0 : i64, scratch_operands = 0 : i64, tpu.core_type = #tpu.core_type<tc>, window_params = [{transform_indices = @transform_0, window_bounds = array<i64: 8, 16>}, {transform_indices = @transform_1, window_bounds = array<i64: 8, 1>}, {transform_indices = @transform_2, window_bounds = array<i64: 8, 1>}, {transform_indices = @transform_3, window_bounds = array<i64: 1, 1, 1>}]} {
    %c0 = arith.constant 0 : index
    %c0_0 = arith.constant 0 : index
    %0 = vector.load %arg1[%c0, %c0_0] : memref<8x16xf32, #tpu.memory_space<vmem>>, vector<8x16xf32>
    %c0_1 = arith.constant 0 : index
    %c0_2 = arith.constant 0 : index
    %1 = vector.load %arg2[%c0_1, %c0_2] : memref<8x1xi32, #tpu.memory_space<vmem>>, vector<8x1xi32>
    %c0_3 = arith.constant 0 : index
    %c0_4 = arith.constant 0 : index
    %2 = vector.load %arg3[%c0_3, %c0_4] : memref<8x1xf32, #tpu.memory_space<vmem>>, vector<8x1xf32>
    %3 = tpu.iota {dimensions = array<i32: 1>} : vector<8x16xi32>
    %4 = vector.broadcast %1 : vector<8x1xi32> to vector<8x16xi32>
    %5 = arith.cmpi eq, %3, %4 : vector<8x16xi32>
    %cst = arith.constant dense<0xFF800000> : vector<8xf32>
    %6 = vector.multi_reduction <maximumf>, %0, %cst [1] : vector<8x16xf32> to vector<8xf32>
    %7 = vector.shape_cast %6 : vector<8xf32> to vector<8x1xf32>
    %8 = vector.broadcast %7 : vector<8x1xf32> to vector<8x16xf32>
    %9 = arith.subf %0, %8 : vector<8x16xf32>
    %10 = math.exp %9 : vector<8x16xf32>
    %cst_5 = arith.constant dense<0.000000e+00> : vector<8xf32>
    %11 = vector.multi_reduction <add>, %10, %cst_5 [1] : vector<8x16xf32> to vector<8xf32>
    %12 = vector.shape_cast %11 : vector<8xf32> to vector<8x1xf32>
    %cst_6 = arith.constant 0.000000e+00 : f32
    %13 = vector.broadcast %cst_6 : f32 to vector<8x16xf32>
    %14 = arith.select %5, %10, %13 : vector<8x16xi1>, vector<8x16xf32>
    %cst_7 = arith.constant dense<0.000000e+00> : vector<8xf32>
    %15 = vector.multi_reduction <add>, %14, %cst_7 [1] : vector<8x16xf32> to vector<8xf32>
    %16 = vector.shape_cast %15 : vector<8xf32> to vector<8x1xf32>
    %cst_8 = arith.constant 0.000000e+00 : f32
    %17 = vector.broadcast %cst_8 : f32 to vector<8x16xf32>
    %18 = arith.select %5, %0, %17 : vector<8x16xi1>, vector<8x16xf32>
    %cst_9 = arith.constant dense<0.000000e+00> : vector<8xf32>
    %19 = vector.multi_reduction <add>, %18, %cst_9 [1] : vector<8x16xf32> to vector<8xf32>
    %20 = vector.shape_cast %19 : vector<8xf32> to vector<8x1xf32>
    %21 = math.log %12 : vector<8x1xf32>
    %22 = arith.subf %7, %20 : vector<8x1xf32>
    %23 = arith.addf %21, %22 : vector<8x1xf32>
    %cst_10 = arith.constant 0.000000e+00 : f32
    %24 = vector.broadcast %cst_10 : f32 to vector<8x1xf32>
    %25 = arith.maximumf %23, %24 : vector<8x1xf32>
    %26 = tpu.reciprocal %12 {approx = true} : vector<8x1xf32> -> vector<8x1xf32>
    %27 = arith.mulf %16, %26 : vector<8x1xf32>
    %cst_11 = arith.constant 1.000000e+00 : f32
    %28 = vector.broadcast %cst_11 : f32 to vector<8x1xf32>
    %29 = arith.subf %28, %27 : vector<8x1xf32>
    %cst_12 = arith.constant 0.000000e+00 : f32
    %30 = vector.broadcast %cst_12 : f32 to vector<8x1xf32>
    %31 = arith.maximumf %29, %30 : vector<8x1xf32>
    %32 = arith.mulf %31, %31 : vector<8x1xf32>
    %33 = arith.mulf %32, %25 : vector<8x1xf32>
    %34 = arith.mulf %2, %33 : vector<8x1xf32>
    %35 = vector.shape_cast %34 : vector<8x1xf32> to vector<1x8x1xf32>
    %cst_13 = arith.constant dense<0.000000e+00> : vector<1xf32>
    %36 = vector.multi_reduction <add>, %35, %cst_13 [1, 2] : vector<1x8x1xf32> to vector<1xf32>
    %37 = vector.shape_cast %36 : vector<1xf32> to vector<1x1x1xf32>
    %38 = vector.extract %37[0, 0, 0] : f32 from vector<1x1x1xf32>
    %39 = vector.broadcast %38 : f32 to vector<1x1x1xf32>
    %c0_14 = arith.constant 0 : index
    %c0_15 = arith.constant 0 : index
    %c0_16 = arith.constant 0 : index
    %40 = vector.load %arg4[%c0_14, %c0_15, %c0_16] : memref<1x1x1xf32, #tpu.memory_space<vmem>>, vector<1x1x1xf32>
    tpu.vector_store %arg4[%c0_14, %c0_15, %c0_16], %39 {strides = array<i32>} : memref<1x1x1xf32, #tpu.memory_space<vmem>>, vector<1x1x1xf32>,
    return
  }
  func.func @transform_0(%arg0: i32) -> (i32, i32) {
    %c0_i32 = arith.constant 0 : i32
    %c0_i32_0 = arith.constant 0 : i32
    return %arg0, %c0_i32 : i32, i32
  }
  func.func @transform_1(%arg0: i32) -> (i32, i32) {
    %c0_i32 = arith.constant 0 : i32
    %c0_i32_0 = arith.constant 0 : i32
    return %arg0, %c0_i32 : i32, i32
  }
  func.func @transform_2(%arg0: i32) -> (i32, i32) {
    %c0_i32 = arith.constant 0 : i32
    %c0_i32_0 = arith.constant 0 : i32
    return %arg0, %c0_i32 : i32, i32
  }
  func.func @transform_3(%arg0: i32) -> (i32, i32, i32) {
    %c0_i32 = arith.constant 0 : i32
    %c0_i32_0 = arith.constant 0 : i32
    %c0_i32_1 = arith.constant 0 : i32
    return %arg0, %c0_i32, %c0_i32_0 : i32, i32, i32
  }
}

</mosaic_0001>

<llo_original>
// kernel: tpu_custom_call.1
$region0: #{tpu_custom_call.1}
  #allocation0 [shape = 'u32[]', space=smem, size = 0x4, offset = 0x4, fixed_abs, tag = 'smem constant byte address 0x4 - core index']
  #allocation1 [shape = 'u32[144,128]{1,0:T(1,128)}', space=vmem, size = 0x12000, scoped, tag = 'internal scratch']
  %s0 = inlined_call_operand.vmem [shape: f32[8,16], index: 0, kind: input, shape index: {}]
  %s1 = inlined_call_operand.vmem [shape: s32[8,1], index: 1, kind: input, shape index: {}]
  %s2 = inlined_call_operand.vmem [shape: f32[8,1], index: 2, kind: input, shape index: {}]
  %s3 = inlined_call_operand.hbm [shape: f32[1,1,1], index: 3, kind: output, shape index: {}]
  %s4 = sld [smem:[#allocation0]]
  $region22: #{tpu_custom_call.1} parent=0
    _
  %s6 = ssub.s32 1, %s4
  %s7 = scalar_select 0, %s6, %s4
  $region1: #{tpu_custom_call.1} parent=0
    #allocation2 [shape = 'u8[512]{0}', space=vmem, size = 0x400, scoped, tag = 'output window, operand 0, single buffered']
    #allocation3 [shape = 's32[1]{0}', space=sflag, size = 0x4, scoped, tag = 'scoped memory for tpu_custom_call.1']
    %8 = vsyncpa [#allocation3], 0
    // Predicated region
    $region2: #{tpu_custom_call.1} parent=1 // pred_check
      _
    $region3: #{tpu_custom_call.1} parent=1 // pred_check_branch
      %10 = sbr.rel (0) target = $region5
    $region4: #{tpu_custom_call.1} parent=1 // pred_region
      _
    $region5: #{tpu_custom_call.1} parent=1 // pred_fallthru
      _
    // Predicated region
    $region6: #{tpu_custom_call.1} parent=1 // pred_check
      _
    $region7: #{tpu_custom_call.1} parent=1 // pred_check_branch
      %12 = sbr.rel (0) target = $region9
    $region8: #{tpu_custom_call.1} parent=1 // pred_region
      _
    $region9: #{tpu_custom_call.1} parent=1 // pred_fallthru
      _
    // Predicated region
    $region10: #{tpu_custom_call.1} parent=1 // pred_check
      _
    $region11: #{tpu_custom_call.1} parent=1 // pred_check_branch
      %14 = sbr.rel (0) target = $region13
    $region12: #{tpu_custom_call.1} parent=1 // pred_region
      _
    $region13: #{tpu_custom_call.1} parent=1 // pred_fallthru
      _
    %v15 = vld [vmem:[%s0] sm:$0xff]
    %v16 = vld [vmem:[%s1] sm:$0xff]
    %v17 = vld [vmem:[%s2] sm:$0xff]
    %v18 = vlaneseq
    %v19 = vand.u32 %v18, 127
    %20 = vset.pattern.permute.xlu0 0
    %21 = vperm.xlu0 %20, %v16
    %v22 = vpop.permute.xlu0 %21
    %vm23 = vcmp.eq.s32.totalorder %v19, %v22
    %vm24 = vcmask 130048
    %v25 = vsel %vm24, %v15, -inf
    %26 = vmax.xlane.f32.xlu0 %v25
    %v27 = vpop.xlane.xlu0 %26
    %v28 = vsub.f32 %v15, %v27
    %v29 = vmul.f32 %v28, 1.442695
    %v30 = vpow.pop %v29
    %v31 = vsel %vm24, %v30, 0.0
    %32 = vadd.xlane.f32.xlu0 %v31
    %v33 = vpop.xlane.xlu0 %32
    %v34 = vsel %vm23, %v30, 0.0
    %v35 = vsel %vm24, %v34, 0.0
    %36 = vadd.xlane.f32.xlu0 %v35
    %v37 = vpop.xlane.xlu0 %36
    %v38 = vsel %vm23, %v15, 0.0
    %v39 = vsel %vm24, %v38, 0.0
    %40 = vadd.xlane.f32.xlu0 %v39
    %v41 = vpop.xlane.xlu0 %40
    %v42 = vlog2.pop %v33
    %v43 = vmul.f32 %v42, 0.6931472
    %v44 = vsub.f32 %v27, %v41
    %v45 = vadd.f32 %v43, %v44
    %v46 = vmax.f32 %v45, 0.0
    %v47 = vrcp.pop %v33
    %v48 = vmul.f32 %v37, %v47
    %v49 = vsub.f32 1.0, %v48
    %v50 = vmax.f32 %v49, 0.0
    %v51 = vmul.f32 %v50, %v50
    %v52 = vmul.f32 %v51, %v46
    %v53 = vmul.f32 %v17, %v52
    %vm54 = vcmask 7168
    %v55 = vsel %vm54, %v53, 0.0
    %56 = vadd.xlane.f32.xlu0 %v55
    %v57 = vpop.xlane.xlu0 %56
    %v58 = vrot.slane %v57, 4
    %v59 = vadd.f32 %v57, %v58
    %v60 = vrot.slane %v59, 2
    %v61 = vadd.f32 %v59, %v60
    %v62 = vrot.slane %v61, 1
    %v63 = vadd.f32 %v61, %v62
    %s64 = vtos %v63
    %v65 = vstv %s64
    %vm66 = vcmask 0
    %67 = vst.msk [vmem:[#allocation2] sm:$0x1] %vm66, %v65
    // Predicated region
    $region14: #{tpu_custom_call.1} parent=1 // pred_check
      _
    $region15: #{tpu_custom_call.1} parent=1 // pred_check_branch
      %69 = sbr.rel (0) target = $region17
    $region16: #{tpu_custom_call.1} parent=1 // pred_region
      %s71 = ssub.s32 16, 16
      %72 = vsyncadd [#allocation3], %s71
      %s74 = sshll.u32 [#allocation2], 4
      %s75 = int_to_ptr.vmem [resolvable:$true] %s74
      %77 = dma.vmem_to_hbm [thread:$0]  %s75, 16, %s3, [#allocation3]
    $region17: #{tpu_custom_call.1} parent=1 // pred_fallthru
      _
    // Predicated region
    $region18: #{tpu_custom_call.1} parent=1 // pred_check
      _
    $region19: #{tpu_custom_call.1} parent=1 // pred_check_branch
      %79 = sbr.rel (0) target = $region21
    $region20: #{tpu_custom_call.1} parent=1 // pred_region
      %80 = dma.done [#allocation3], 16
    $region21: #{tpu_custom_call.1} parent=1 // pred_fallthru
      _
    %81 = vsyncpa [#allocation3], 1

</llo_original>
